<compile_context>
chip_gen: v6e
topology: v6e:2x2x1
jax: 0.10.0
libtpu: 0.0.40
codegen_flags: <defaults>
</compile_context>

<pallas_src>
import functools

import jax
import jax.numpy as jnp
from jax.experimental import pallas as pl
from jax.experimental.pallas import tpu as pltpu

NUM_CLASSES = 10  # stand-in for len(CAT_ID_TO_ATTRIBUTE)


def _head_kernel(x_ref, w1_ref, b1_ref, w2_ref, b2_ref, out_ref):
    # Layer 1: Linear(in_features, in_features // 2) + ReLU  (f32 MXU accumulate)
    h = jnp.dot(x_ref[...], w1_ref[...], preferred_element_type=jnp.float32)
    h = jnp.maximum(h + b1_ref[...], 0.0)
    # Layer 2: Linear(in_features // 2, NUM_CLASSES)
    logits = jnp.dot(h, w2_ref[...], preferred_element_type=jnp.float32) + b2_ref[...]
    # Single dense store for the whole tile (no per-slice masked stores).
    out_ref[...] = logits.astype(out_ref.dtype)


@functools.partial(jax.jit, static_argnames=("block_b",))
def direct_prediction_head(x, params, *, block_b=512):
    """x: [B, F] float32.  params: {'w1':[F,H], 'b1':[1,H], 'w2':[H,C], 'b2':[1,C]}."""
    B, F = x.shape
    H = params["w1"].shape[1]
    C = params["w2"].shape[1]

    # Pick a batch tile: big tiles for big batches, otherwise one full-extent tile
    # (padded to a multiple of 8 sublanes).
    if B >= block_b:
        tb = block_b
    else:
        tb = max(8, ((B + 7) // 8) * 8)
    b_pad = pl.cdiv(B, tb) * tb
    if b_pad != B:
        x = jnp.pad(x, ((0, b_pad - B), (0, 0)))

    grid = (b_pad // tb,)

    weight_bytes = sum(int(p.size) * p.dtype.itemsize for p in params.values())
    cost = pl.CostEstimate(
        flops=2 * b_pad * (F * H + H * C),
        transcendentals=0,
        bytes_accessed=b_pad * F * x.dtype.itemsize + weight_bytes + b_pad * C * 4,
    )

    out = pl.pallas_call(
        _head_kernel,
        out_shape=jax.ShapeDtypeStruct((b_pad, C), jnp.float32),
        grid=grid,
        in_specs=[
            pl.BlockSpec((tb, F), lambda i: (i, 0)),   # x: tiled over batch
            pl.BlockSpec((F, H), lambda i: (0, 0)),    # w1: resident
            pl.BlockSpec((1, H), lambda i: (0, 0)),    # b1: resident
            pl.BlockSpec((H, C), lambda i: (0, 0)),    # w2: resident
            pl.BlockSpec((1, C), lambda i: (0, 0)),    # b2: resident
        ],
        out_specs=pl.BlockSpec((tb, C), lambda i: (i, 0)),
        compiler_params=pltpu.CompilerParams(
            dimension_semantics=("parallel",),
        ),
        cost_estimate=cost,
    )(x, params["w1"], params["b1"], params["w2"], params["b2"])

    return out[:B]


def init_params(key, in_features, num_classes=NUM_CLASSES):
    """Deterministic init matching nn.Linear shapes (U(-1/sqrt(fan_in), +))."""
    H = in_features // 2
    ks = jax.random.split(key, 4)

    def lin(kw, kb, fan_in, fan_out):
        bound = 1.0 / jnp.sqrt(fan_in)
        # torch Linear weight is [out, in]; we store it transposed as [in, out]
        w = jax.random.uniform(kw, (fan_in, fan_out), jnp.float32, -bound, bound)
        b = jax.random.uniform(kb, (1, fan_out), jnp.float32, -bound, bound)
        return w, b

    w1, b1 = lin(ks[0], ks[1], in_features, H)       # nn.Linear(in, in//2)
    w2, b2 = lin(ks[2], ks[3], H, num_classes)       # nn.Linear(in//2, num_classes)
    return {"w1": w1, "b1": b1, "w2": w2, "b2": b2}


def reference_forward(x, p):
    """Pure-JAX reference of DirectPredictionHead.forward for validation."""
    h = jax.nn.relu(x @ p["w1"] + p["b1"])
    return h @ p["w2"] + p["b2"]


if __name__ == "__main__":
    B, F = 8, 32  # batch, in_features (hidden = in_features // 2 = 16)
    key = jax.random.PRNGKey(0)
    kx, kp = jax.random.split(key)
    x = jax.random.normal(kx, (B, F), jnp.float32)
    params = init_params(kp, F)

    out = direct_prediction_head(x, params)
    out = jax.block_until_ready(out)

    ref = reference_forward(x, params)
    assert out.shape == (B, NUM_CLASSES), out.shape
    assert jnp.allclose(out, ref, atol=1e-5, rtol=1e-5), "mismatch vs reference"

    print("KERNEL_OK")
</pallas_src>

<mosaic_0001>
module attributes {stable_mosaic.version = 11 : i64} {
  func.func @_head_kernel(%arg0: i32, %arg1: memref<8x32xf32, #tpu.memory_space<vmem>>, %arg2: memref<32x16xf32, #tpu.memory_space<vmem>>, %arg3: memref<1x16xf32, #tpu.memory_space<vmem>>, %arg4: memref<16x10xf32, #tpu.memory_space<vmem>>, %arg5: memref<1x10xf32, #tpu.memory_space<vmem>>, %arg6: memref<8x10xf32, #tpu.memory_space<vmem>>) attributes {dimension_semantics = [#tpu.dimension_semantics<parallel>], iteration_bounds = array<i64: 1>, scalar_prefetch = 0 : i64, scratch_operands = 0 : i64, tpu.core_type = #tpu.core_type<tc>, window_params = [{transform_indices = @transform_0, window_bounds = array<i64: 8, 32>}, {pipeline_mode = #tpu.pipeline_mode<synchronous>, transform_indices = @transform_1, window_bounds = array<i64: 32, 16>}, {pipeline_mode = #tpu.pipeline_mode<synchronous>, transform_indices = @transform_2, window_bounds = array<i64: 1, 16>}, {pipeline_mode = #tpu.pipeline_mode<synchronous>, transform_indices = @transform_3, window_bounds = array<i64: 16, 10>}, {pipeline_mode = #tpu.pipeline_mode<synchronous>, transform_indices = @transform_4, window_bounds = array<i64: 1, 10>}, {transform_indices = @transform_5, window_bounds = array<i64: 8, 10>}]} {
    %c0 = arith.constant 0 : index
    %c0_0 = arith.constant 0 : index
    %0 = vector.load %arg1[%c0, %c0_0] : memref<8x32xf32, #tpu.memory_space<vmem>>, vector<8x32xf32>
    %c0_1 = arith.constant 0 : index
    %c0_2 = arith.constant 0 : index
    %1 = vector.load %arg2[%c0_1, %c0_2] : memref<32x16xf32, #tpu.memory_space<vmem>>, vector<32x16xf32>
    %cst = arith.constant dense<0.000000e+00> : vector<8x16xf32>
    %2 = tpu.matmul %0, %1, %cst {dimension_numbers = #tpu.dot_dimension_numbers<[1], [0], [0], [1], [0, 0, 1, 1], [], []>} : vector<8x32xf32>, vector<32x16xf32>, vector<8x16xf32> -> vector<8x16xf32>
    %c0_3 = arith.constant 0 : index
    %c0_4 = arith.constant 0 : index
    %3 = vector.load %arg3[%c0_3, %c0_4] : memref<1x16xf32, #tpu.memory_space<vmem>>, vector<1x16xf32>
    %4 = vector.broadcast %3 : vector<1x16xf32> to vector<8x16xf32>
    %5 = arith.addf %2, %4 : vector<8x16xf32>
    %cst_5 = arith.constant 0.000000e+00 : f32
    %6 = vector.broadcast %cst_5 : f32 to vector<8x16xf32>
    %7 = arith.maximumf %5, %6 : vector<8x16xf32>
    %c0_6 = arith.constant 0 : index
    %c0_7 = arith.constant 0 : index
    %8 = vector.load %arg4[%c0_6, %c0_7] : memref<16x10xf32, #tpu.memory_space<vmem>>, vector<16x10xf32>
    %cst_8 = arith.constant dense<0.000000e+00> : vector<8x10xf32>
    %9 = tpu.matmul %7, %8, %cst_8 {dimension_numbers = #tpu.dot_dimension_numbers<[1], [0], [0], [1], [0, 0, 1, 1], [], []>} : vector<8x16xf32>, vector<16x10xf32>, vector<8x10xf32> -> vector<8x10xf32>
    %c0_9 = arith.constant 0 : index
    %c0_10 = arith.constant 0 : index
    %10 = vector.load %arg5[%c0_9, %c0_10] : memref<1x10xf32, #tpu.memory_space<vmem>>, vector<1x10xf32>
    %11 = vector.broadcast %10 : vector<1x10xf32> to vector<8x10xf32>
    %12 = arith.addf %9, %11 : vector<8x10xf32>
    %c0_11 = arith.constant 0 : index
    %c0_12 = arith.constant 0 : index
    %13 = vector.load %arg6[%c0_11, %c0_12] : memref<8x10xf32, #tpu.memory_space<vmem>>, vector<8x10xf32>
    tpu.vector_store %arg6[%c0_11, %c0_12], %12 {strides = array<i32>} : memref<8x10xf32, #tpu.memory_space<vmem>>, vector<8x10xf32>,
    return
  }
  func.func @transform_0(%arg0: i32) -> (i32, i32) {
    %c0_i32 = arith.constant 0 : i32
    %c0_i32_0 = arith.constant 0 : i32
    return %arg0, %c0_i32 : i32, i32
  }
  func.func @transform_1(%arg0: i32) -> (i32, i32) {
    %c0_i32 = arith.constant 0 : i32
    %c0_i32_0 = arith.constant 0 : i32
    %c0_i32_1 = arith.constant 0 : i32
    return %c0_i32, %c0_i32_0 : i32, i32
  }
  func.func @transform_2(%arg0: i32) -> (i32, i32) {
    %c0_i32 = arith.constant 0 : i32
    %c0_i32_0 = arith.constant 0 : i32
    %c0_i32_1 = arith.constant 0 : i32
    return %c0_i32, %c0_i32_0 : i32, i32
  }
  func.func @transform_3(%arg0: i32) -> (i32, i32) {
    %c0_i32 = arith.constant 0 : i32
    %c0_i32_0 = arith.constant 0 : i32
    %c0_i32_1 = arith.constant 0 : i32
    return %c0_i32, %c0_i32_0 : i32, i32
  }
  func.func @transform_4(%arg0: i32) -> (i32, i32) {
    %c0_i32 = arith.constant 0 : i32
    %c0_i32_0 = arith.constant 0 : i32
    %c0_i32_1 = arith.constant 0 : i32
    return %c0_i32, %c0_i32_0 : i32, i32
  }
  func.func @transform_5(%arg0: i32) -> (i32, i32) {
    %c0_i32 = arith.constant 0 : i32
    %c0_i32_0 = arith.constant 0 : i32
    return %arg0, %c0_i32 : i32, i32
  }
}

</mosaic_0001>

<llo_original>
// kernel: direct_prediction_head.1
$region0: #{direct_prediction_head.1}
  #allocation0 [shape = 'u32[]', space=smem, size = 0x4, offset = 0x4, fixed_abs, tag = 'smem constant byte address 0x4 - core index']
  #allocation1 [shape = 'u32[144,128]{1,0:T(1,128)}', space=vmem, size = 0x12000, scoped, tag = 'internal scratch']
  %s0 = inlined_call_operand.vmem [shape: f32[8,32], index: 0, kind: input, shape index: {}]
  %s1 = inlined_call_operand.vmem [shape: f32[32,16], index: 1, kind: input, shape index: {}]
  %s2 = inlined_call_operand.vmem [shape: f32[1,16], index: 2, kind: input, shape index: {}]
  %s3 = inlined_call_operand.vmem [shape: f32[16,10], index: 3, kind: input, shape index: {}]
  %s4 = inlined_call_operand.vmem [shape: f32[1,10], index: 4, kind: input, shape index: {}]
  %s5 = inlined_call_operand.hbm [shape: f32[8,10], index: 5, kind: output, shape index: {}]
  %s6 = sld [smem:[#allocation0]]
  $region30: #{direct_prediction_head.1} parent=0
    _
  %s8 = ssub.s32 1, %s6
  %s9 = scalar_select 0, %s8, %s6
  $region1: #{direct_prediction_head.1} parent=0
    #allocation2 [shape = 'u8[4096]{0}', space=vmem, size = 0x1000, scoped, tag = 'output window, operand 0, single buffered']
    #allocation3 [shape = 's32[1]{0}', space=sflag, size = 0x4, scoped, tag = 'scoped memory for direct_prediction_head.1']
    %10 = vsyncpa [#allocation3], 0
    // Predicated region
    $region2: #{direct_prediction_head.1} parent=1 // pred_check
      _
    $region3: #{direct_prediction_head.1} parent=1 // pred_check_branch
      %12 = sbr.rel (0) target = $region5
    $region4: #{direct_prediction_head.1} parent=1 // pred_region
      _
    $region5: #{direct_prediction_head.1} parent=1 // pred_fallthru
      _
    // Predicated region
    $region6: #{direct_prediction_head.1} parent=1 // pred_check
      _
    $region7: #{direct_prediction_head.1} parent=1 // pred_check_branch
      %14 = sbr.rel (0) target = $region9
    $region8: #{direct_prediction_head.1} parent=1 // pred_region
      _
    $region9: #{direct_prediction_head.1} parent=1 // pred_fallthru
      _
    // Predicated region
    $region10: #{direct_prediction_head.1} parent=1 // pred_check
      _
    $region11: #{direct_prediction_head.1} parent=1 // pred_check_branch
      %16 = sbr.rel (0) target = $region13
    $region12: #{direct_prediction_head.1} parent=1 // pred_region
      _
    $region13: #{direct_prediction_head.1} parent=1 // pred_fallthru
      _
    // Predicated region
    $region14: #{direct_prediction_head.1} parent=1 // pred_check
      _
    $region15: #{direct_prediction_head.1} parent=1 // pred_check_branch
      %18 = sbr.rel (0) target = $region17
    $region16: #{direct_prediction_head.1} parent=1 // pred_region
      _
    $region17: #{direct_prediction_head.1} parent=1 // pred_fallthru
      _
    // Predicated region
    $region18: #{direct_prediction_head.1} parent=1 // pred_check
      _
    $region19: #{direct_prediction_head.1} parent=1 // pred_check_branch
      %20 = sbr.rel (0) target = $region21
    $region20: #{direct_prediction_head.1} parent=1 // pred_region
      _
    $region21: #{direct_prediction_head.1} parent=1 // pred_fallthru
      _
    %v21 = vld [vmem:[%s0] sm:$0xff]
    %v22 = vld [vmem:[%s1] sm:$0xff]
    %v23 = vld [vmem:[%s1 + $0x8] sm:$0xff]
    %v24 = vld [vmem:[%s1 + $0x10] sm:$0xff]
    %v25 = vld [vmem:[%s1 + $0x18] sm:$0xff]
    %v26 = vld [vmem:[%s2] sm:$0x1]
    %v28 = vlaneseq
    %v29 = vshrl.u32 %v28, 7
    %v30 = vsub.s32 0, %v29
    %v31 = vrot.slane %v26, %v30
    %vm33 = vcmask 261120
    %v35 = vsel %vm33, %v21, 0
    %37 = vmatprep.subr.mxu0 0.0
    %38 = vmatpush1.msra.mxu0 0.0
    %39 = vmatprep.subr.mxu0 0.0
    %40 = vmatpush1.msra.mxu0 0.0
    %41 = vmatprep.subr.mxu0 0.0
    %42 = vmatpush1.msra.mxu0 0.0
    %43 = vmatprep.subr.mxu0 0.0
    %44 = vmatpush1.msra.mxu0 0.0
    %45 = vmatprep.subr.mxu0 0.0
    %46 = vmatpush1.msra.mxu0 0.0
    %47 = vmatprep.subr.mxu0 0.0
    %48 = vmatpush1.msra.mxu0 0.0
    %49 = vmatprep.subr.mxu0 0.0
    %50 = vmatpush1.msra.mxu0 0.0
    %51 = vmatprep.subr.mxu0 0.0
    %52 = vmatpush1.msra.mxu0 0.0
    %53 = vmatprep.subr.mxu0 0.0
    %54 = vmatpush1.msra.mxu0 0.0
    %55 = vmatprep.subr.mxu0 0.0
    %56 = vmatpush1.msra.mxu0 0.0
    %57 = vmatprep.subr.mxu0 0.0
    %58 = vmatpush1.msra.mxu0 0.0
    %59 = vmatprep.subr.mxu0 0.0
    %60 = vmatpush1.msra.mxu0 0.0
    %61 = vmatprep.subr.mxu0 0.0
    %62 = vmatpush1.msra.mxu0 %v25
    %63 = vmatprep.subr.mxu0 0.0
    %64 = vmatpush1.msra.mxu0 %v24
    %65 = vmatprep.subr.mxu0 0.0
    %66 = vmatpush1.msra.mxu0 %v23
    %67 = vmatprep.subr.mxu0 0.0
    %68 = vmatpush1.msra.mxu0 %v22
    %69 = vmatprep.subr.mxu0 0.0
    %70 = vmatpush2.msra.mxu0 0.0
    %71 = vmatprep.subr.mxu0 0.0
    %72 = vmatpush2.msra.mxu0 0.0
    %73 = vmatprep.subr.mxu0 0.0
    %74 = vmatpush2.msra.mxu0 0.0
    %75 = vmatprep.subr.mxu0 0.0
    %76 = vmatpush2.msra.mxu0 0.0
    %77 = vmatprep.subr.mxu0 0.0
    %78 = vmatpush2.msra.mxu0 0.0
    %79 = vmatprep.subr.mxu0 0.0
    %80 = vmatpush2.msra.mxu0 0.0
    %81 = vmatprep.subr.mxu0 0.0
    %82 = vmatpush2.msra.mxu0 0.0
    %83 = vmatprep.subr.mxu0 0.0
    %84 = vmatpush2.msra.mxu0 0.0
    %85 = vmatprep.subr.mxu0 0.0
    %86 = vmatpush2.msra.mxu0 0.0
    %87 = vmatprep.subr.mxu0 0.0
    %88 = vmatpush2.msra.mxu0 0.0
    %89 = vmatprep.subr.mxu0 0.0
    %90 = vmatpush2.msra.mxu0 0.0
    %91 = vmatprep.subr.mxu0 0.0
    %92 = vmatpush2.msra.mxu0 0.0
    %93 = vmatprep.subr.mxu0 0.0
    %94 = vmatpush2.msra.mxu0 0.0
    %95 = vmatprep.subr.mxu0 0.0
    %96 = vmatpush2.msra.mxu0 0.0
    %97 = vmatprep.subr.mxu0 0.0
    %98 = vmatpush2.msra.mxu0 0.0
    %99 = vmatprep.subr.mxu0 0.0
    %100 = vmatpush2.msra.mxu0 0.0
    %101 = vmatprep.mubr.f32.mxu0 0.0
    %102 = vmatmul.mubr.f32.gmra.mxu0 %v35
    %v103 = vpop.f32.mrf.mxu0
    %v104 = vadd.f32 %v31, %v103
    %v105 = vpop.f32.mrf.mxu0
    %106 = vdwg.mxu0
    %v107 = vmax.f32 %v104, 0.0
    %v108 = vld [vmem:[%s3] sm:$0xff]
    %v109 = vld [vmem:[%s3 + $0x8] sm:$0xff]
    %v110 = vld [vmem:[%s4] sm:$0x1]
    %v112 = vlaneseq
    %v113 = vshrl.u32 %v112, 7
    %v114 = vsub.s32 0, %v113
    %v115 = vrot.slane %v110, %v114
    %vm117 = vcmask 130048
    %v119 = vsel %vm117, %v107, 0
    %121 = vmatprep.subr.mxu0 0.0
    %122 = vmatpush1.msra.mxu0 0.0
    %123 = vmatprep.subr.mxu0 0.0
    %124 = vmatpush1.msra.mxu0 0.0
    %125 = vmatprep.subr.mxu0 0.0
    %126 = vmatpush1.msra.mxu0 0.0
    %127 = vmatprep.subr.mxu0 0.0
    %128 = vmatpush1.msra.mxu0 0.0
    %129 = vmatprep.subr.mxu0 0.0
    %130 = vmatpush1.msra.mxu0 0.0
    %131 = vmatprep.subr.mxu0 0.0
    %132 = vmatpush1.msra.mxu0 0.0
    %133 = vmatprep.subr.mxu0 0.0
    %134 = vmatpush1.msra.mxu0 0.0
    %135 = vmatprep.subr.mxu0 0.0
    %136 = vmatpush1.msra.mxu0 0.0
    %137 = vmatprep.subr.mxu0 0.0
    %138 = vmatpush1.msra.mxu0 0.0
    %139 = vmatprep.subr.mxu0 0.0
    %140 = vmatpush1.msra.mxu0 0.0
    %141 = vmatprep.subr.mxu0 0.0
    %142 = vmatpush1.msra.mxu0 0.0
    %143 = vmatprep.subr.mxu0 0.0
    %144 = vmatpush1.msra.mxu0 0.0
    %145 = vmatprep.subr.mxu0 0.0
    %146 = vmatpush1.msra.mxu0 0.0
    %147 = vmatprep.subr.mxu0 0.0
    %148 = vmatpush1.msra.mxu0 0.0
    %149 = vmatprep.subr.mxu0 0.0
    %150 = vmatpush1.msra.mxu0 %v109
    %151 = vmatprep.subr.mxu0 0.0
    %152 = vmatpush1.msra.mxu0 %v108
    %153 = vmatprep.subr.mxu0 0.0
    %154 = vmatpush2.msra.mxu0 0.0
    %155 = vmatprep.subr.mxu0 0.0
    %156 = vmatpush2.msra.mxu0 0.0
    %157 = vmatprep.subr.mxu0 0.0
    %158 = vmatpush2.msra.mxu0 0.0
    %159 = vmatprep.subr.mxu0 0.0
    %160 = vmatpush2.msra.mxu0 0.0
    %161 = vmatprep.subr.mxu0 0.0
    %162 = vmatpush2.msra.mxu0 0.0
    %163 = vmatprep.subr.mxu0 0.0
    %164 = vmatpush2.msra.mxu0 0.0
    %165 = vmatprep.subr.mxu0 0.0
    %166 = vmatpush2.msra.mxu0 0.0
    %167 = vmatprep.subr.mxu0 0.0
    %168 = vmatpush2.msra.mxu0 0.0
    %169 = vmatprep.subr.mxu0 0.0
    %170 = vmatpush2.msra.mxu0 0.0
    %171 = vmatprep.subr.mxu0 0.0
    %172 = vmatpush2.msra.mxu0 0.0
    %173 = vmatprep.subr.mxu0 0.0
    %174 = vmatpush2.msra.mxu0 0.0
    %175 = vmatprep.subr.mxu0 0.0
    %176 = vmatpush2.msra.mxu0 0.0
    %177 = vmatprep.subr.mxu0 0.0
    %178 = vmatpush2.msra.mxu0 0.0
    %179 = vmatprep.subr.mxu0 0.0
    %180 = vmatpush2.msra.mxu0 0.0
    %181 = vmatprep.subr.mxu0 0.0
    %182 = vmatpush2.msra.mxu0 0.0
    %183 = vmatprep.subr.mxu0 0.0
    %184 = vmatpush2.msra.mxu0 0.0
    %185 = vmatprep.mubr.f32.mxu0 0.0
    %186 = vmatmul.mubr.f32.gmra.mxu0 %v119
    %v187 = vpop.f32.mrf.mxu0
    %v188 = vadd.f32 %v115, %v187
    %v189 = vpop.f32.mrf.mxu0
    %190 = vdwg.mxu0
    %vm191 = vcmask 80896
    %192 = vst.msk [vmem:[#allocation2] sm:$0xff] %vm191, %v188
    // Predicated region
    $region22: #{direct_prediction_head.1} parent=1 // pred_check
      _
    $region23: #{direct_prediction_head.1} parent=1 // pred_check_branch
      %194 = sbr.rel (0) target = $region25
    $region24: #{direct_prediction_head.1} parent=1 // pred_region
      %s196 = ssub.s32 128, 128
      %197 = vsyncadd [#allocation3], %s196
      %s199 = sshll.u32 [#allocation2], 4
      %s200 = int_to_ptr.vmem [resolvable:$true] %s199
      %202 = dma.vmem_to_hbm [thread:$0]  %s200, 128, %s5, [#allocation3]
    $region25: #{direct_prediction_head.1} parent=1 // pred_fallthru
      _
    // Predicated region
    $region26: #{direct_prediction_head.1} parent=1 // pred_check
      _
    $region27: #{direct_prediction_head.1} parent=1 // pred_check_branch
      %204 = sbr.rel (0) target = $region29
    $region28: #{direct_prediction_head.1} parent=1 // pred_region
      %205 = dma.done [#allocation3], 128
    $region29: #{direct_prediction_head.1} parent=1 // pred_fallthru
      _
    %206 = vsyncpa [#allocation3], 1

</llo_original>
